<compile_context>
chip_gen: v7x
topology: tpu7x:2x2x1
jax: 0.10.0
libtpu: 0.0.40
codegen_flags: <defaults>
</compile_context>

<pallas_src>
import math

import jax
import jax.numpy as jnp
from jax.experimental import pallas as pl
from jax.experimental.pallas import tpu as pltpu


LANE = 128                       # TPU lane width: last dim of every block
TARGET_BLOCK_BYTES = 1 << 20     # ~1 MiB per VMEM buffer per stream


# ------------------------------ Pallas kernel -------------------------------


def h_swish_kernel(x_ref, o_ref):
    # x_ref / o_ref: (TM, 128) VMEM tiles.
    x = x_ref[...].astype(jnp.float32)
    # ReLU6(x + 3) * (1/6): clamp to [0, 6], multiply by reciprocal (no div).
    hsig = jnp.minimum(jnp.maximum(x + 3.0, 0.0), 6.0) * (1.0 / 6.0)
    o_ref[...] = (x * hsig).astype(o_ref.dtype)


# --------------------------------- wrapper ----------------------------------


def _round_up(x, m):
    return ((x + m - 1) // m) * m


def h_swish(x):
    """Elementwise h_swish for an arbitrary-shaped array."""
    orig_shape = x.shape
    dtype = x.dtype
    total = math.prod(orig_shape) if orig_shape else 1

    itemsize = jnp.dtype(dtype).itemsize
    # Native sublane tile height for this dtype (f32->8, bf16->16, int8->32).
    row_align = 8 * max(1, 4 // itemsize)
    # Rows per grid step: ~TARGET_BLOCK_BYTES per buffer, multiple of row_align.
    max_tm = max(row_align, (TARGET_BLOCK_BYTES // (LANE * itemsize)) // row_align * row_align)

    # Lane-dense 2-D layout: (rows, 128).
    rows = -(-total // LANE)
    tm = min(max_tm, _round_up(rows, row_align))
    padded_rows = _round_up(rows, tm)
    padded_total = padded_rows * LANE

    xf = x.reshape(-1)
    if padded_total != total:
        xf = jnp.pad(xf, (0, padded_total - total))
    x2d = xf.reshape(padded_rows, LANE)

    grid = (padded_rows // tm,)
    out = pl.pallas_call(
        h_swish_kernel,
        out_shape=jax.ShapeDtypeStruct((padded_rows, LANE), dtype),
        grid=grid,
        in_specs=[pl.BlockSpec((tm, LANE), lambda i: (i, 0))],
        out_specs=pl.BlockSpec((tm, LANE), lambda i: (i, 0)),
        compiler_params=pltpu.CompilerParams(
            dimension_semantics=("parallel",),
        ),
    )(x2d)

    if padded_total != total:
        out = out.reshape(-1)[:total]
    return out.reshape(orig_shape)


# ---------------------------- pure-JAX reference -----------------------------


def h_swish_reference(x):
    return x * (jnp.clip(x + 3.0, 0.0, 6.0) / 6.0)


# ----------------------------------- main ------------------------------------


if __name__ == "__main__":
    key = jax.random.PRNGKey(0)

    # Small NCHW input consistent with how h_swish is used inside the blocks.
    N, C, H, W = 2, 4, 16, 16
    x = jax.random.normal(key, (N, C, H, W), jnp.float32) * 4.0  # hit both clamp edges

    fwd = jax.jit(h_swish)
    out = jax.block_until_ready(fwd(x))

    assert out.shape == x.shape, out.shape

    ref = jax.block_until_ready(h_swish_reference(x))
    max_err = float(jnp.max(jnp.abs(out - ref)))
    assert max_err < 1e-6, f"mismatch vs reference: {max_err}"

    # Shape that is NOT a multiple of 128 elements (pad / un-pad path).
    x2 = jax.random.normal(jax.random.PRNGKey(1), (3, 5, 7, 9), jnp.float32)
    out2 = jax.block_until_ready(jax.jit(h_swish)(x2))
    max_err2 = float(jnp.max(jnp.abs(out2 - h_swish_reference(x2))))
    assert max_err2 < 1e-6, f"mismatch vs reference (ragged): {max_err2}"

    # bf16 path (exercises dtype-aware row alignment + f32 compute).
    x3 = jax.random.normal(jax.random.PRNGKey(2), (2, 4, 16, 16), jnp.bfloat16)
    out3 = jax.block_until_ready(jax.jit(h_swish)(x3))
    ref3 = h_swish_reference(x3.astype(jnp.float32)).astype(jnp.bfloat16)
    max_err3 = float(jnp.max(jnp.abs(out3.astype(jnp.float32) - ref3.astype(jnp.float32))))
    assert max_err3 < 1e-1, f"mismatch vs reference (bf16): {max_err3}"

    print("KERNEL_OK")
</pallas_src>

<mosaic_0001>
module attributes {stable_mosaic.version = 11 : i64} {
  func.func @h_swish_kernel(%arg0: i32, %arg1: memref<16x128xf32, #tpu.memory_space<vmem>>, %arg2: memref<16x128xf32, #tpu.memory_space<vmem>>) attributes {dimension_semantics = [#tpu.dimension_semantics<parallel>], iteration_bounds = array<i64: 1>, scalar_prefetch = 0 : i64, scratch_operands = 0 : i64, tpu.core_type = #tpu.core_type<tc>, window_params = [{transform_indices = @transform_0, window_bounds = array<i64: 16, 128>}, {transform_indices = @transform_1, window_bounds = array<i64: 16, 128>}]} {
    %c0 = arith.constant 0 : index
    %c0_0 = arith.constant 0 : index
    %0 = vector.load %arg1[%c0, %c0_0] : memref<16x128xf32, #tpu.memory_space<vmem>>, vector<16x128xf32>
    %cst = arith.constant 3.000000e+00 : f32
    %1 = vector.broadcast %cst : f32 to vector<16x128xf32>
    %2 = arith.addf %0, %1 : vector<16x128xf32>
    %cst_1 = arith.constant 0.000000e+00 : f32
    %3 = vector.broadcast %cst_1 : f32 to vector<16x128xf32>
    %4 = arith.maximumf %2, %3 : vector<16x128xf32>
    %cst_2 = arith.constant 6.000000e+00 : f32
    %5 = vector.broadcast %cst_2 : f32 to vector<16x128xf32>
    %6 = arith.minimumf %4, %5 : vector<16x128xf32>
    %cst_3 = arith.constant 0.166666672 : f32
    %7 = vector.broadcast %cst_3 : f32 to vector<16x128xf32>
    %8 = arith.mulf %6, %7 : vector<16x128xf32>
    %9 = arith.mulf %0, %8 : vector<16x128xf32>
    %c0_4 = arith.constant 0 : index
    %c0_5 = arith.constant 0 : index
    %10 = vector.load %arg2[%c0_4, %c0_5] : memref<16x128xf32, #tpu.memory_space<vmem>>, vector<16x128xf32>
    tpu.vector_store %arg2[%c0_4, %c0_5], %9 {strides = array<i32>} : memref<16x128xf32, #tpu.memory_space<vmem>>, vector<16x128xf32>,
    return
  }
  func.func @transform_0(%arg0: i32) -> (i32, i32) {
    %c0_i32 = arith.constant 0 : i32
    %c0_i32_0 = arith.constant 0 : i32
    return %arg0, %c0_i32 : i32, i32
  }
  func.func @transform_1(%arg0: i32) -> (i32, i32) {
    %c0_i32 = arith.constant 0 : i32
    %c0_i32_0 = arith.constant 0 : i32
    return %arg0, %c0_i32 : i32, i32
  }
}

</mosaic_0001>

<llo_original>
// kernel: h_swish.1
$region0: #{h_swish.1}
  #allocation0 [shape = 'u32[]', space=smem, size = 0x4, offset = 0x4, fixed_abs, tag = 'smem constant byte address 0x4 - core index']
  #allocation1 [shape = 'u32[144,128]{1,0:T(1,128)}', space=vmem, size = 0x12000, scoped, tag = 'internal scratch']
  %s0 = inlined_call_operand.vmem [shape: f32[16,128], index: 0, kind: input, shape index: {}]
  %s1 = inlined_call_operand.vmem [shape: f32[16,128], index: 1, kind: output, shape index: {}]
  %s2 = sld [smem:[#allocation0]]
  $region14: #{h_swish.1} parent=0
    _
  %s4 = ssub.s32 1, %s2
  %s5 = scalar_select 0, %s4, %s2
  // Predicated region
  $region2: #{h_swish.1} parent=0 // pred_check
    _
  $region3: #{h_swish.1} parent=0 // pred_check_branch
    %7 = sbr.rel (0) target = $region5
  $region4: #{h_swish.1} parent=0 // pred_region
    _
  $region5: #{h_swish.1} parent=0 // pred_fallthru
    _
  %v8 = vld [vmem:[%s0] sm:$0xff]
  %v9 = vld [vmem:[%s0 + $0x8] sm:$0xff]
  %v10 = vadd.f32 %v8, 3.0
  %v11 = vadd.f32 %v9, 3.0
  %v12 = vmax.f32 %v10, 0.0
  %v13 = vmax.f32 %v11, 0.0
  %v14 = vmin.f32 %v12, 6.0
  %v15 = vmin.f32 %v13, 6.0
  %v16 = vmul.f32 %v14, 0.16666667
  %v17 = vmul.f32 %v15, 0.16666667
  %v18 = vmul.f32 %v8, %v16
  %v19 = vmul.f32 %v9, %v17
  %20 = vst [vmem:[%s1] sm:$0xff] %v18
  %21 = vst [vmem:[%s1 + $0x8] sm:$0xff] %v19
  // Predicated region
  $region6: #{h_swish.1} parent=0 // pred_check
    _
  $region7: #{h_swish.1} parent=0 // pred_check_branch
    %23 = sbr.rel (0) target = $region9
  $region8: #{h_swish.1} parent=0 // pred_region
    _
  $region9: #{h_swish.1} parent=0 // pred_fallthru
    _
  // Predicated region
  $region10: #{h_swish.1} parent=0 // pred_check
    _
  $region11: #{h_swish.1} parent=0 // pred_check_branch
    %25 = sbr.rel (0) target = $region13
  $region12: #{h_swish.1} parent=0 // pred_region
    _
  $region13: #{h_swish.1} parent=0 // pred_fallthru
    _

</llo_original>
